<compile_context>
chip_gen: v7x
topology: tpu7x:2x2x1
jax: 0.10.0
libtpu: 0.0.40
codegen_flags: <defaults>
</compile_context>

<pallas_src>
import functools

import jax
import jax.numpy as jnp
from jax.experimental import pallas as pl
from jax.experimental.pallas import tpu as pltpu


LANES = 128                # lane width (last dim of every block)
TARGET_BLOCK_ROWS = 4096   # rows per grid step: 2 MiB/input/buffer in f32;
                           # 2 inputs x 2 buffers = 8 MiB, within the default
                           # scoped-VMEM limit on v5e (16 MiB) / v6e / v7x (32 MiB).


def _device_kind() -> str:
    try:
        return str(jax.devices()[0].device_kind).lower()
    except Exception:
        return ""


def _num_tensorcores() -> int:
    # v7x has 2 TensorCores per chip; v5e / v6e have 1.  Perf-only heuristic
    # (a wrong guess is still correct, just slightly slower).
    return 2 if "v7" in _device_kind() else 1


def _has_bf16_vpu() -> bool:
    # v6e / v7x have bf16 VALUs; v5e does not (must upcast before compute).
    kind = _device_kind()
    return ("v6" in kind) or ("v7" in kind)


def _triplet_kernel(pos_ref, neg_ref, out_ref, *, margin, n_valid,
                    block_rows, steps_per_core, num_clean_blocks,
                    needs_mask, acc_rows, bf16_sub):
    """One grid step: ReLU(neg - pos + margin), slab-accumulated into (8,128)."""
    c = pl.program_id(0)   # partial-sum / TensorCore index  ("parallel")
    i = pl.program_id(1)   # streaming step within the core  ("arbitrary")

    @pl.when(i == 0)
    def _init():
        out_ref[...] = jnp.zeros_like(out_ref)

    if bf16_sub:
        # bf16 subtract on the VPU (2x elements per vreg op), one widening
        # cast instead of two; accumulation stays f32.
        hinge = jnp.maximum(
            (neg_ref[...] - pos_ref[...]).astype(jnp.float32)
            + jnp.float32(margin),
            jnp.float32(0.0))
    else:
        pos = pos_ref[...].astype(jnp.float32)
        neg = neg_ref[...].astype(jnp.float32)
        hinge = jnp.maximum(neg - pos + jnp.float32(margin), jnp.float32(0.0))

    def slab_sum(x):
        if acc_rows == 8:
            # (block_rows,128) -> (block_rows//8, 8, 128), summed over the
            # slab axis: tile-aligned reshape + pure-VPU elementwise adds.
            return x.reshape(block_rows // 8, 8, LANES).sum(axis=0)
        # Tiny-input path (rows < 8): single small reduce.
        return jnp.sum(x, axis=0, keepdims=True)

    if not needs_mask:
        out_ref[...] += slab_sum(hinge)
    else:
        blk = c * steps_per_core + i          # logical (un-clamped) block id
        is_clean = blk < num_clean_blocks     # fully valid & non-clamped block

        @pl.when(is_clean)
        def _hot():                            # steady state: no mask work
            out_ref[...] += slab_sum(hinge)

        @pl.when(jnp.logical_not(is_clean))
        def _cold():                           # ragged / lane-pad / clamped
            # Global flat index of every element in this block; anything past
            # the true element count (lane pad, Pallas-padded ragged tail, or
            # a clamped duplicate overflow block) contributes exactly 0.
            # Note: int32 index math — fine for inputs < 2^31 elements.
            base = blk * (block_rows * LANES)
            row = jax.lax.broadcasted_iota(jnp.int32, (block_rows, LANES), 0)
            lane = jax.lax.broadcasted_iota(jnp.int32, (block_rows, LANES), 1)
            gidx = base + row * LANES + lane
            out_ref[...] += slab_sum(
                jnp.where(gidx < n_valid, hinge, jnp.float32(0.0)))


def triplet_loss(anchor_pos, anchor_neg, margin):
    """JAX wrapper: view as [rows, 128] and stream through the Pallas kernel."""
    assert anchor_pos.shape == anchor_neg.shape
    assert anchor_pos.dtype == anchor_neg.dtype

    pos = anchor_pos.reshape(-1)
    neg = anchor_neg.reshape(-1)
    n = int(pos.shape[0])
    if n == 0:
        return jnp.float32(0.0)

    rows = -(-n // LANES)            # ceil(n / 128)
    n128 = rows * LANES
    if n128 != n:
        # Lane-ragged tail only (< 128 elements): tiny zero pad so the free
        # reshape to [rows, 128] is possible; masked out inside the kernel.
        pos = jnp.pad(pos, (0, n128 - n))
        neg = jnp.pad(neg, (0, n128 - n))
    pos2d = pos.reshape(rows, LANES)
    neg2d = neg.reshape(rows, LANES)

    # Megacore sharding only pays off on 2-TensorCore chips (v7x); on
    # single-TC chips a size-2 "parallel" axis is just a serial loop that
    # forces masked clamped blocks.
    num_partials = _num_tensorcores() if rows >= 16 else 1

    if rows >= 8:
        block_rows = min(TARGET_BLOCK_ROWS, (rows // 8) * 8)
        acc_rows = 8
    else:
        block_rows = rows            # block equals full dim -> always legal
        acc_rows = 1

    grid_blocks = -(-rows // block_rows)

    # v7x load balance: aim for an even block count so both TensorCores get
    # real (non-clamped) work.
    if num_partials == 2 and grid_blocks % 2 == 1:
        target_blocks = grid_blocks + 1
        new_block_rows = ((-(-rows // target_blocks) + 7) // 8) * 8
        if new_block_rows >= 8:
            block_rows = new_block_rows
            grid_blocks = -(-rows // block_rows)

    if grid_blocks < 2:
        num_partials = 1             # nothing worth sharding across cores

    steps_per_core = -(-grid_blocks // num_partials)
    covered = num_partials * steps_per_core * block_rows * LANES
    needs_mask = covered != n
    # Blocks with logical index below this are fully valid and never clamped.
    num_clean_blocks = min(grid_blocks, n // (block_rows * LANES))

    bf16_sub = (pos2d.dtype == jnp.bfloat16) and _has_bf16_vpu()

    def idx_map(c, i):
        # Clamp overflow steps (odd block counts / a core with nothing left)
        # onto the last valid block; their contribution is masked to 0.
        return (jnp.minimum(c * steps_per_core + i, grid_blocks - 1), 0)

    kernel = functools.partial(
        _triplet_kernel,
        margin=float(margin),
        n_valid=n,
        block_rows=block_rows,
        steps_per_core=steps_per_core,
        num_clean_blocks=num_clean_blocks,
        needs_mask=needs_mask,
        acc_rows=acc_rows,
        bf16_sub=bf16_sub,
    )

    out = pl.pallas_call(
        kernel,
        out_shape=jax.ShapeDtypeStruct((num_partials, acc_rows, LANES),
                                       jnp.float32),
        grid_spec=pltpu.PrefetchScalarGridSpec(
            num_scalar_prefetch=0,
            grid=(num_partials, steps_per_core),
            in_specs=[
                pl.BlockSpec((block_rows, LANES), idx_map),
                pl.BlockSpec((block_rows, LANES), idx_map),
            ],
            out_specs=pl.BlockSpec((None, acc_rows, LANES),
                                   lambda c, i: (c, 0, 0)),
        ),
        compiler_params=pltpu.CompilerParams(
            dimension_semantics=("parallel", "arbitrary"),
        ),
    )(pos2d, neg2d)

    # Final reduce of num_partials * acc_rows * 128 f32 partials — trivial.
    return jnp.sum(out)


def triplet_loss_ref(anchor_pos, anchor_neg, margin):
    """Pure-JAX reference matching the PyTorch forward."""
    return jnp.sum(
        jnp.maximum(anchor_neg.astype(jnp.float32)
                    - anchor_pos.astype(jnp.float32)
                    + jnp.float32(margin), 0.0)
    )


if __name__ == "__main__":
    margin = 0.5  # deterministic "parameter" from __init__

    key = jax.random.PRNGKey(0)
    k1, k2, k3, k4 = jax.random.split(key, 4)

    # Primary check: small (batch, channels, H, W) input, exact lane multiple.
    shape = (2, 4, 16, 16)
    anchor_pos = jax.random.normal(k1, shape, dtype=jnp.float32)
    anchor_neg = jax.random.normal(k2, shape, dtype=jnp.float32)

    loss = triplet_loss(anchor_pos, anchor_neg, margin)
    loss = jax.block_until_ready(loss)
    ref = triplet_loss_ref(anchor_pos, anchor_neg, margin)
    assert jnp.allclose(loss, ref, rtol=1e-5, atol=1e-5), (loss, ref)

    # Secondary check: lane-ragged element count exercises the masked branch.
    rshape = (3, 5, 7)
    rpos = jax.random.normal(k3, rshape, dtype=jnp.float32)
    rneg = jax.random.normal(k4, rshape, dtype=jnp.float32)
    rloss = jax.block_until_ready(triplet_loss(rpos, rneg, margin))
    rref = triplet_loss_ref(rpos, rneg, margin)
    assert jnp.allclose(rloss, rref, rtol=1e-5, atol=1e-5), (rloss, rref)

    print("KERNEL_OK")
</pallas_src>

<mosaic_0001>
module attributes {stable_mosaic.version = 11 : i64} {
  func.func @_triplet_kernel(%arg0: i32, %arg1: i32, %arg2: memref<16x128xf32, #tpu.memory_space<vmem>>, %arg3: memref<16x128xf32, #tpu.memory_space<vmem>>, %arg4: memref<1x8x128xf32, #tpu.memory_space<vmem>>) attributes {dimension_semantics = [#tpu.dimension_semantics<parallel>, #tpu.dimension_semantics<arbitrary>], iteration_bounds = array<i64: 1, 1>, scalar_prefetch = 0 : i64, scratch_operands = 0 : i64, tpu.core_type = #tpu.core_type<tc>, window_params = [{transform_indices = @transform_0, window_bounds = array<i64: 16, 128>}, {transform_indices = @transform_1, window_bounds = array<i64: 16, 128>}, {transform_indices = @transform_2, window_bounds = array<i64: 1, 8, 128>}]} {
    %c0_i32 = arith.constant 0 : i32
    %0 = arith.cmpi eq, %arg1, %c0_i32 : i32
    %1 = arith.extui %0 : i1 to i32
    %c0_i32_0 = arith.constant 0 : i32
    %2 = arith.cmpi ne, %1, %c0_i32_0 : i32
    scf.if %2 {
      %cst_12 = arith.constant 0.000000e+00 : f32
      %18 = vector.broadcast %cst_12 : f32 to vector<8x128xf32>
      %c0_13 = arith.constant 0 : index
      %c0_14 = arith.constant 0 : index
      %c0_15 = arith.constant 0 : index
      %19 = vector.load %arg4[%c0_13, %c0_14, %c0_15] : memref<1x8x128xf32, #tpu.memory_space<vmem>>, vector<1x8x128xf32>
      %20 = vector.shape_cast %19 : vector<1x8x128xf32> to vector<8x128xf32>
      %21 = vector.shape_cast %18 : vector<8x128xf32> to vector<1x8x128xf32>
      tpu.vector_store %arg4[%c0_13, %c0_14, %c0_15], %21 {strides = array<i32>} : memref<1x8x128xf32, #tpu.memory_space<vmem>>, vector<1x8x128xf32>,
    } else {
    }
    %c0 = arith.constant 0 : index
    %c0_1 = arith.constant 0 : index
    %3 = vector.load %arg2[%c0, %c0_1] : memref<16x128xf32, #tpu.memory_space<vmem>>, vector<16x128xf32>
    %c0_2 = arith.constant 0 : index
    %c0_3 = arith.constant 0 : index
    %4 = vector.load %arg3[%c0_2, %c0_3] : memref<16x128xf32, #tpu.memory_space<vmem>>, vector<16x128xf32>
    %5 = arith.subf %4, %3 : vector<16x128xf32>
    %cst = arith.constant 5.000000e-01 : f32
    %6 = vector.broadcast %cst : f32 to vector<16x128xf32>
    %7 = arith.addf %5, %6 : vector<16x128xf32>
    %cst_4 = arith.constant 0.000000e+00 : f32
    %8 = vector.broadcast %cst_4 : f32 to vector<16x128xf32>
    %9 = arith.maximumf %7, %8 : vector<16x128xf32>
    %c0_5 = arith.constant 0 : index
    %c0_6 = arith.constant 0 : index
    %c0_7 = arith.constant 0 : index
    %10 = vector.load %arg4[%c0_5, %c0_6, %c0_7] : memref<1x8x128xf32, #tpu.memory_space<vmem>>, vector<1x8x128xf32>
    %11 = vector.shape_cast %10 : vector<1x8x128xf32> to vector<8x128xf32>
    %12 = vector.shape_cast %9 : vector<16x128xf32> to vector<2x8x128xf32>
    %cst_8 = arith.constant dense<0.000000e+00> : vector<8x128xf32>
    %13 = vector.multi_reduction <add>, %12, %cst_8 [0] : vector<2x8x128xf32> to vector<8x128xf32>
    %14 = arith.addf %11, %13 : vector<8x128xf32>
    %c0_9 = arith.constant 0 : index
    %c0_10 = arith.constant 0 : index
    %c0_11 = arith.constant 0 : index
    %15 = vector.load %arg4[%c0_9, %c0_10, %c0_11] : memref<1x8x128xf32, #tpu.memory_space<vmem>>, vector<1x8x128xf32>
    %16 = vector.shape_cast %15 : vector<1x8x128xf32> to vector<8x128xf32>
    %17 = vector.shape_cast %14 : vector<8x128xf32> to vector<1x8x128xf32>
    tpu.vector_store %arg4[%c0_9, %c0_10, %c0_11], %17 {strides = array<i32>} : memref<1x8x128xf32, #tpu.memory_space<vmem>>, vector<1x8x128xf32>,
    return
  }
  func.func @transform_0(%arg0: i32, %arg1: i32) -> (i32, i32) {
    %c1_i32 = arith.constant 1 : i32
    %0 = arith.muli %arg0, %c1_i32 : i32
    %1 = arith.addi %0, %arg1 : i32
    %c0_i32 = arith.constant 0 : i32
    %2 = arith.minsi %1, %c0_i32 : i32
    %c0_i32_0 = arith.constant 0 : i32
    %c0_i32_1 = arith.constant 0 : i32
    return %2, %c0_i32_0 : i32, i32
  }
  func.func @transform_1(%arg0: i32, %arg1: i32) -> (i32, i32) {
    %c1_i32 = arith.constant 1 : i32
    %0 = arith.muli %arg0, %c1_i32 : i32
    %1 = arith.addi %0, %arg1 : i32
    %c0_i32 = arith.constant 0 : i32
    %2 = arith.minsi %1, %c0_i32 : i32
    %c0_i32_0 = arith.constant 0 : i32
    %c0_i32_1 = arith.constant 0 : i32
    return %2, %c0_i32_0 : i32, i32
  }
  func.func @transform_2(%arg0: i32, %arg1: i32) -> (i32, i32, i32) {
    %c0_i32 = arith.constant 0 : i32
    %c0_i32_0 = arith.constant 0 : i32
    %c0_i32_1 = arith.constant 0 : i32
    return %arg0, %c0_i32, %c0_i32_0 : i32, i32, i32
  }
}

</mosaic_0001>

<llo_original>
// kernel: tpu_custom_call.1
$region0: #{tpu_custom_call.1}
  #allocation0 [shape = 'u32[]', space=smem, size = 0x4, offset = 0x4, fixed_abs, tag = 'smem constant byte address 0x4 - core index']
  #allocation1 [shape = 'u32[144,128]{1,0:T(1,128)}', space=vmem, size = 0x12000, scoped, tag = 'internal scratch']
  %s0 = inlined_call_operand.hbm [shape: f32[16,128], index: 0, kind: input, shape index: {}]
  %s1 = inlined_call_operand.hbm [shape: f32[16,128], index: 1, kind: input, shape index: {}]
  %s2 = inlined_call_operand.hbm [shape: f32[1,8,128], index: 2, kind: output, shape index: {}]
  %s3 = sld [smem:[#allocation0]]
  $region30: #{tpu_custom_call.1} parent=0
    _
  %s5 = ssub.s32 1, %s3
  %s6 = scalar_select 0, %s5, %s3
  $region1: #{tpu_custom_call.1} parent=0
    #allocation2 [shape = 'u8[8192]{0}', space=vmem, size = 0x2000, scoped, tag = 'input window, operand 0, single buffered']
    #allocation3 [shape = 's32[1]{0}', space=sflag, size = 0x4, scoped, tag = 'scoped memory for tpu_custom_call.1']
    #allocation4 [shape = 's32[1]{0}', space=sflag, size = 0x4, scoped, tag = 'scoped memory for tpu_custom_call.1']
    #allocation5 [shape = 'u8[8192]{0}', space=vmem, size = 0x2000, scoped, tag = 'input window, operand 1, single buffered']
    #allocation6 [shape = 's32[1]{0}', space=sflag, size = 0x4, scoped, tag = 'scoped memory for tpu_custom_call.1']
    #allocation7 [shape = 'u8[4096]{0}', space=vmem, size = 0x1000, scoped, tag = 'output window, operand 0, single buffered']
    %7 = vsyncpa [#allocation3], 0
    %8 = vsyncpa [#allocation6], 0
    %9 = vsyncpa [#allocation4], 0
    // Predicated region
    $region2: #{tpu_custom_call.1} parent=1 // pred_check
      _
    $region3: #{tpu_custom_call.1} parent=1 // pred_check_branch
      %11 = sbr.rel (0) target = $region5
    $region4: #{tpu_custom_call.1} parent=1 // pred_region
      %s12 = sadd.s32 0, 0
      %p13 = scmp.lt.s32.totalorder %s12, 0
      %s14 = scalar_select %p13, %s12, 0
      %s15 = smul.u32 2, %s14
      %s17 = ssub.s32 256, 256
      %18 = vsyncadd [#allocation3], %s17
      %s19 = smul.addr %s15, 128
      %s20 = scalar_lea.hbm %s0, %s19
      %s21 = sshll.u32 [#allocation2], 4
      %s22 = int_to_ptr.vmem [resolvable:$true] %s21
      %27 = dma.hbm_to_vmem [thread:$0]  %s20, 256, %s22, [#allocation3], 128, 128, 8
    $region5: #{tpu_custom_call.1} parent=1 // pred_fallthru
      _
    // Predicated region
    $region6: #{tpu_custom_call.1} parent=1 // pred_check
      _
    $region7: #{tpu_custom_call.1} parent=1 // pred_check_branch
      %29 = sbr.rel (0) target = $region9
    $region8: #{tpu_custom_call.1} parent=1 // pred_region
      %s30 = sadd.s32 0, 0
      %p31 = scmp.lt.s32.totalorder %s30, 0
      %s32 = scalar_select %p31, %s30, 0
      %s33 = smul.u32 2, %s32
      %s35 = ssub.s32 256, 256
      %36 = vsyncadd [#allocation6], %s35
      %s37 = smul.addr %s33, 128
      %s38 = scalar_lea.hbm %s1, %s37
      %s39 = sshll.u32 [#allocation5], 4
      %s40 = int_to_ptr.vmem [resolvable:$true] %s39
      %45 = dma.hbm_to_vmem [thread:$0]  %s38, 256, %s40, [#allocation6], 128, 128, 8
    $region9: #{tpu_custom_call.1} parent=1 // pred_fallthru
      _
    // Predicated region
    $region10: #{tpu_custom_call.1} parent=1 // pred_check
      _
    $region11: #{tpu_custom_call.1} parent=1 // pred_check_branch
      %47 = sbr.rel (0) target = $region13
    $region12: #{tpu_custom_call.1} parent=1 // pred_region
      %48 = dma.done [#allocation3], 256
    $region13: #{tpu_custom_call.1} parent=1 // pred_fallthru
      _
    // Predicated region
    $region14: #{tpu_custom_call.1} parent=1 // pred_check
      _
    $region15: #{tpu_custom_call.1} parent=1 // pred_check_branch
      %50 = sbr.rel (0) target = $region17
    $region16: #{tpu_custom_call.1} parent=1 // pred_region
      %51 = dma.done [#allocation6], 256
    $region17: #{tpu_custom_call.1} parent=1 // pred_fallthru
      _
    %s52 = sadd.s32 0, 0
    %p53 = scmp.lt.s32.totalorder %s52, 0
    %s54 = scalar_select %p53, %s52, 0
    %s55 = smul.u32 2, %s54
    %s56 = sadd.s32 0, 0
    %p57 = scmp.lt.s32.totalorder %s56, 0
    %s58 = scalar_select %p57, %s56, 0
    %s59 = smul.u32 2, %s58
    %p60 = scmp.eq.s32.totalorder 0, 0
    // Predicated region
    $region18: #{tpu_custom_call.1} parent=1 // pred_check
      %p61 = pneg %p60
    $region19: #{tpu_custom_call.1} parent=1 // pred_check_branch
      %63 = sbr.rel (%p61) target = $region21
    $region20: #{tpu_custom_call.1} parent=1 // pred_region
      %64 = vst [vmem:[#allocation7] sm:$0xff] 0.0
    $region21: #{tpu_custom_call.1} parent=1 // pred_fallthru
      _
    %v65 = vld [vmem:[#allocation2] sm:$0xff]
    %v66 = vld [vmem:[#allocation2 + $0x8] sm:$0xff]
    %v67 = vld [vmem:[#allocation5] sm:$0xff]
    %v68 = vld [vmem:[#allocation5 + $0x8] sm:$0xff]
    %v69 = vsub.f32 %v67, %v65
    %v70 = vsub.f32 %v68, %v66
    %v71 = vadd.f32 %v69, 0.5
    %v72 = vadd.f32 %v70, 0.5
    %v73 = vmax.f32 %v71, 0.0
    %v74 = vmax.f32 %v72, 0.0
    %v75 = vld [vmem:[#allocation7] sm:$0xff]
    %v76 = vadd.f32 %v73, %v74
    %v77 = vadd.f32 %v75, %v76
    %78 = vst [vmem:[#allocation7] sm:$0xff] %v77
    // Predicated region
    $region22: #{tpu_custom_call.1} parent=1 // pred_check
      _
    $region23: #{tpu_custom_call.1} parent=1 // pred_check_branch
      %80 = sbr.rel (0) target = $region25
    $region24: #{tpu_custom_call.1} parent=1 // pred_region
      %s82 = ssub.s32 128, 128
      %83 = vsyncadd [#allocation4], %s82
      %s85 = sshll.u32 [#allocation7], 4
      %s86 = int_to_ptr.vmem [resolvable:$true] %s85
      %88 = dma.vmem_to_hbm [thread:$0]  %s86, 128, %s2, [#allocation4]
    $region25: #{tpu_custom_call.1} parent=1 // pred_fallthru
      _
    // Predicated region
    $region26: #{tpu_custom_call.1} parent=1 // pred_check
      _
    $region27: #{tpu_custom_call.1} parent=1 // pred_check_branch
      %90 = sbr.rel (0) target = $region29
    $region28: #{tpu_custom_call.1} parent=1 // pred_region
      %91 = dma.done [#allocation4], 128
    $region29: #{tpu_custom_call.1} parent=1 // pred_fallthru
      _
    %92 = vsyncpa [#allocation3], 1
    %93 = vsyncpa [#allocation6], 1
    %94 = vsyncpa [#allocation4], 1

</llo_original>
